<compile_context>
chip_gen: v7x
topology: tpu7x:2x2x1
jax: 0.10.0
libtpu: 0.0.40
codegen_flags: <defaults>
</compile_context>

<pallas_src>
import jax
import jax.numpy as jnp
import numpy as np
from jax.experimental import pallas as pl
from jax.experimental.pallas import tpu as pltpu

# ---- model dims -------------------------------------------------------------
D = 4     # data dimension ('D' in [..., N, D])
H1 = 8    # exclusive-net hidden width per output dimension
K = 8     # per-dim feature size h_i produced by the exclusive net
M = 16    # dimwise-net hidden width

NH1 = D * H1                    # 32  rows of h1
NK = D * K                      # 32  rows of h2
NM = D * M                      # 64  rows of z / u
NX = NH1 + NM                   # 96  rows of the stacked x-consuming weight
NOUT = 2 * D                    # 8   output rows (y stacked over jac)
NBIAS = NH1 + NK + NM + NOUT    # 136 packed bias rows


def _cdiv(a, b):
    return (a + b - 1) // b


def _round_up(x, m):
    return _cdiv(x, m) * m


def _default_compute_dtype():
    """bf16 EUP/VPU (packed tanh, halved ld/st bytes) on v6e/v7x; f32 on v5e and older."""
    try:
        kind = jax.devices()[0].device_kind.lower()
    except Exception:
        return jnp.float32
    if ("v6" in kind) or ("v7" in kind) or ("tpu7" in kind) or ("7x" in kind):
        return jnp.bfloat16
    return jnp.float32


def _check_hollow(w1m):
    """Best-effort guard: the analytic diag-Jacobian is exact only if hidden block i of the
    exclusive net never sees x_i (hollow-masked first-layer weight). Skipped under tracing."""
    try:
        w = np.asarray(w1m).reshape(D, H1, D)
    except Exception:
        return
    diag = w[np.arange(D), :, np.arange(D)]
    assert np.all(diag == 0.0), "exclusive-net first-layer weight must be hollow-masked"


# ---- Pallas kernel factory ---------------------------------------------------
def _make_kernel(nchunks, ch):
    """nchunks sub-chunks of ch lanes each cover the L-lane tile (nchunks * ch == L)."""

    def kernel(x_ref, wx_ref, w2_ref, wzh_ref, wy_ref, wjn_ref, b_ref, out_ref):
        f32 = jnp.float32
        cdt = x_ref.dtype                       # compute dtype (f32 or bf16)

        # Loop-invariant loads / views, hoisted out of the chunk loop.
        wx = wx_ref[...]                        # [96, 4]   stacked [w1m; wzx]
        w2 = w2_ref[...]                        # [32, 32]  block-diag exclusive layer 2
        wzh = wzh_ref[...]                      # [64, 32]  block-diag dimwise h-path
        wy = wy_ref[...]                        # [8, 64]   y reduction (rows 0:4), zero below
        wjn = wjn_ref[...]                      # [8, 64]   -jac reduction (rows 4:8), zero above
        b_h1 = b_ref[0:NH1, :]                  # [32, 1]   t*wt1 + b1 (f32)
        b_h2 = b_ref[NH1:NH1 + NK, :]           # [32, 1]
        b_z = b_ref[NH1 + NK:NH1 + NK + NM, :]  # [64, 1]
        b_o = b_ref[NH1 + NK + NM:, :]          # [8, 1]    [bd2 ; sum(jw)] (jac fold)

        def chunk(c):
            start = c * ch
            if not isinstance(start, int):
                start = pl.multiple_of(start, 128)
            sl = pl.ds(start, ch)

            x = x_ref[:, sl]                                             # [D, ch] (cdt)
            # single stacked x matmul: rows 0:32 feed h1, rows 32:96 are the direct x-path of z
            xw = jnp.dot(wx, x, preferred_element_type=f32)              # [96, ch] f32

            # exclusive (hollow-Jacobian) net
            h1 = jnp.tanh((xw[:NH1, :] + b_h1).astype(cdt))              # [32, ch] cdt
            h2 = jnp.tanh((jnp.dot(w2, h1, preferred_element_type=f32)
                           + b_h2).astype(cdt))                          # [32, ch] cdt

            # dimwise net hidden layer (h-path + direct x-path + t-folded bias)
            z = (jnp.dot(wzh, h2, preferred_element_type=f32)
                 + xw[NH1:, :] + b_z)                                    # [64, ch] f32 acc
            u = jnp.tanh(z.astype(cdt))                                  # [64, ch] cdt

            # fused y / diag-jac reductions:
            #   rows 0:D = wy·u + bd2 ; rows D:2D = sum(jw) - jw·u² = jw·(1-u²)
            out = (jnp.dot(wy, u, preferred_element_type=f32)
                   + jnp.dot(wjn, u * u, preferred_element_type=f32)
                   + b_o)                                                # [8, ch] f32
            out_ref[:, sl] = out.astype(out_ref.dtype)

        if nchunks == 1:
            chunk(0)
        else:
            pl.loop(0, nchunks)(chunk)

    return kernel


# ---- host-side weight packing (grid-invariant, hoisted out of the kernel) ---
def _pack_operands(t, params, compute_dtype):
    w1m, b1, wt1, w2, b2, wd1, bd1, wd2, bd2 = [p.astype(jnp.float32) for p in params]
    _check_hollow(w1m)
    ts = t.astype(jnp.float32).reshape(())
    eye = jnp.eye(D, dtype=jnp.float32)

    w2blk = jnp.kron(eye, w2)                        # [32, 32] block-diag
    wzh = jnp.kron(eye, wd1[:, 2:])                  # [64, 32] block-diag (h-columns of Wd1)
    wzx = jnp.kron(eye, wd1[:, 1:2])                 # [64, 4]  direct x-column of Wd1
    wx = jnp.concatenate([w1m, wzx], axis=0)         # [96, 4]  stacked x-consuming weight
    yw = jnp.kron(eye, wd2)                          # [4, 64]  y reduction
    jw = jnp.kron(eye, wd2 * wd1[:, 1][None, :])     # [4, 64]  jac reduction (Wd2 * dWd1/dx)
    zpad = jnp.zeros_like(yw)
    wy = jnp.concatenate([yw, zpad], axis=0)         # [8, 64]  (y rows on top)
    wj_neg = jnp.concatenate([zpad, -jw], axis=0)    # [8, 64]  (-jac rows on bottom)

    b_h1 = (ts * wt1 + b1).T                                          # [32, 1]
    b_h2 = jnp.tile(b2.T, (D, 1))                                     # [32, 1]
    b_z = jnp.tile((ts * wd1[:, 0] + bd1[0]).reshape(M, 1), (D, 1))   # [64, 1]
    # jac constant fold: jac = jw·1 - jw·u²  ->  put jw.sum into the bias, pass -jw to the kernel.
    b_out = jnp.concatenate([jnp.full((D, 1), bd2[0, 0], jnp.float32),
                             jw.sum(axis=1, keepdims=True)], axis=0)  # [8, 1]
    bias = jnp.concatenate([b_h1, b_h2, b_z, b_out], axis=0)          # [136, 1] (stays f32)

    cdt = compute_dtype
    return (wx.astype(cdt), w2blk.astype(cdt), wzh.astype(cdt),
            wy.astype(cdt), wj_neg.astype(cdt), bias)


# ---- tiling policy -----------------------------------------------------------
def _choose_tile(BN, max_lanes):
    bn128 = _round_up(max(BN, 1), 128)
    if bn128 <= 128:
        return 128, 128
    # >=2 grid steps so both v7x TensorCores get work; cap lane padding via adaptive L.
    n_steps = max(2, _cdiv(bn128, max_lanes))
    L = min(max_lanes, _round_up(_cdiv(bn128, n_steps), 128))
    return L, _round_up(bn128, L)


# ---- wrapper ----------------------------------------------------------------
def diffeq_exact_trace(t, x, params, *, max_lanes=4096, chunk_lanes=512, compute_dtype=None):
    """Returns (y, jac) with the same [B, N, D] shape as x."""
    B, N, Dx = x.shape
    assert Dx == D
    BN = B * N

    cdt = compute_dtype if compute_dtype is not None else _default_compute_dtype()
    cdt = jnp.bfloat16 if np.dtype(cdt) == np.dtype(jnp.bfloat16) else jnp.float32
    out_dtype = cdt   # bf16 writeback halves store + wrapper transpose traffic in bf16 mode

    L, BN_pad = _choose_tile(BN, max_lanes)
    ch = 128
    for cand in (chunk_lanes, 256, 128):
        if L % cand == 0:
            ch = cand
            break
    nchunks = L // ch

    # lane-dense transposed layout: batch axis on the 128-lane axis
    # TODO(synk): the input transpose and the output transpose below are XLA relayout passes
    # outside the kernel; they could be fused in-kernel via XLU transposes if they ever dominate.
    xT = x.reshape(BN, D).astype(cdt).T                              # [D, BN]
    if BN_pad != BN:
        xT = jnp.pad(xT, ((0, 0), (0, BN_pad - BN)))

    wx, w2blk, wzh, wy, wjn, bias = _pack_operands(t, params, cdt)

    col_in = pl.BlockSpec((D, L), lambda i: (0, i))
    col_out = pl.BlockSpec((NOUT, L), lambda i: (0, i))

    def full(a):
        return pl.BlockSpec(a.shape, lambda i: (0, 0))

    grid = BN_pad // L
    weight_bytes = sum(int(a.size) * a.dtype.itemsize
                       for a in (wx, w2blk, wzh, wy, wjn, bias))
    cost = pl.CostEstimate(
        flops=8960 * BN_pad,                 # 2*(96*4 + 32*32 + 64*32 + 2*8*64) per lane column
        transcendentals=128 * BN_pad,        # 32 + 32 + 64 tanh rows per lane column
        bytes_accessed=BN_pad * (D * xT.dtype.itemsize
                                 + NOUT * jnp.dtype(out_dtype).itemsize)
                       + weight_bytes * grid)

    out = pl.pallas_call(
        _make_kernel(nchunks, ch),
        out_shape=jax.ShapeDtypeStruct((NOUT, BN_pad), out_dtype),
        grid_spec=pl.GridSpec(
            grid=(grid,),
            in_specs=[col_in, full(wx), full(w2blk), full(wzh),
                      full(wy), full(wjn), full(bias)],
            out_specs=col_out,
        ),
        compiler_params=pltpu.CompilerParams(dimension_semantics=("parallel",)),
        cost_estimate=cost,
    )(xT, wx, w2blk, wzh, wy, wjn, bias)

    outT = out[:, :BN].T.astype(x.dtype)                             # [BN, 2D], one relayout
    y = outT[:, :D].reshape(B, N, D)
    jac = outT[:, D:].reshape(B, N, D)
    return y, jac


# ---- pure-JAX reference (same math, no Pallas) ------------------------------
def reference(t, x, params):
    w1m, b1, wt1, w2, b2, wd1, bd1, wd2, bd2 = params
    B, N, _ = x.shape
    x2 = x.reshape(-1, D)
    ts = t[0]
    h1 = jnp.tanh(x2 @ w1m.T + ts * wt1 + b1)                       # [BN, D*H1]
    h1r = h1.reshape(-1, D, H1)
    h = jnp.tanh(jnp.einsum('bdh,kh->bdk', h1r, w2) + b2)           # [BN, D, K]
    z = (ts * wd1[:, 0][None, None, :]
         + x2[:, :, None] * wd1[:, 1][None, None, :]
         + jnp.einsum('bdk,mk->bdm', h, wd1[:, 2:]) + bd1)          # [BN, D, M]
    u = jnp.tanh(z)
    y = jnp.einsum('bdm,m->bd', u, wd2[0]) + bd2[0, 0]
    jac = jnp.einsum('bdm,m->bd', 1.0 - u * u, wd2[0] * wd1[:, 1])
    return y.reshape(B, N, D), jac.reshape(B, N, D)


# ---- deterministic parameter construction -----------------------------------
def make_params(key):
    ks = jax.random.split(key, 9)
    s = 0.5
    w1 = jax.random.normal(ks[0], (D * H1, D), jnp.float32) * (s / np.sqrt(D))
    # hollow mask: hidden block i of the exclusive net never sees x_i
    mask = 1.0 - jnp.repeat(jnp.eye(D, dtype=jnp.float32), H1, axis=0)   # [D*H1, D]
    w1m = w1 * mask
    b1 = jax.random.normal(ks[1], (1, D * H1), jnp.float32) * 0.1
    wt1 = jax.random.normal(ks[2], (1, D * H1), jnp.float32) * 0.1
    w2 = jax.random.normal(ks[3], (K, H1), jnp.float32) * (s / np.sqrt(H1))
    b2 = jax.random.normal(ks[4], (1, K), jnp.float32) * 0.1
    wd1 = jax.random.normal(ks[5], (M, 2 + K), jnp.float32) * (s / np.sqrt(2 + K))
    bd1 = jax.random.normal(ks[6], (1, M), jnp.float32) * 0.1
    wd2 = jax.random.normal(ks[7], (1, M), jnp.float32) * (s / np.sqrt(M))
    bd2 = jax.random.normal(ks[8], (1, 1), jnp.float32) * 0.1
    return (w1m, b1, wt1, w2, b2, wd1, bd1, wd2, bd2)


# TODO(synk): the original module wraps a torch.autograd.Function (FuncAndDiagJac) with a custom
# backward pass; only the forward (y, diag-jac) is implemented here, with the diagonal Jacobian
# computed analytically instead of torch.autograd.grad.

if __name__ == "__main__":
    key = jax.random.PRNGKey(0)
    kp, kx1, kx2, kx3 = jax.random.split(key, 4)
    params = make_params(kp)
    t = jnp.array([0.5], jnp.float32)

    cases = [
        jax.random.normal(kx1, (2, 8, D), jnp.float32),     # BN=16   -> 1 grid step, 1 chunk
        jax.random.normal(kx2, (3, 100, D), jnp.float32),   # BN=300  -> L=256, 2 grid steps
        jax.random.normal(kx3, (4, 300, D), jnp.float32),   # BN=1200 -> L=640, 2 steps x 5 chunks
    ]

    # f32 compute path (all TPU generations) — tight tolerance
    for xc in cases:
        y, j = diffeq_exact_trace(t, xc, params, compute_dtype=jnp.float32)
        jax.block_until_ready((y, j))
        yr, jr = reference(t, xc, params)
        np.testing.assert_allclose(np.asarray(y), np.asarray(yr), rtol=1e-4, atol=1e-4)
        np.testing.assert_allclose(np.asarray(j), np.asarray(jr), rtol=1e-4, atol=1e-4)

    # auto compute dtype (bf16 intermediates/tanh on v6e/v7x, f32 elsewhere) — loose tolerance
    xc = cases[-1]
    y, j = diffeq_exact_trace(t, xc, params)
    jax.block_until_ready((y, j))
    yr, jr = reference(t, xc, params)
    np.testing.assert_allclose(np.asarray(y), np.asarray(yr), rtol=5e-2, atol=5e-2)
    np.testing.assert_allclose(np.asarray(j), np.asarray(jr), rtol=5e-2, atol=5e-2)

    print("KERNEL_OK")
</pallas_src>

<mosaic_0001>
module attributes {stable_mosaic.version = 11 : i64} {
  func.func @kernel(%arg0: i32, %arg1: memref<4x128xf32, #tpu.memory_space<vmem>>, %arg2: memref<96x4xf32, #tpu.memory_space<vmem>>, %arg3: memref<32x32xf32, #tpu.memory_space<vmem>>, %arg4: memref<64x32xf32, #tpu.memory_space<vmem>>, %arg5: memref<8x64xf32, #tpu.memory_space<vmem>>, %arg6: memref<8x64xf32, #tpu.memory_space<vmem>>, %arg7: memref<136x1xf32, #tpu.memory_space<vmem>>, %arg8: memref<8x128xf32, #tpu.memory_space<vmem>>) attributes {dimension_semantics = [#tpu.dimension_semantics<parallel>], iteration_bounds = array<i64: 1>, scalar_prefetch = 0 : i64, scratch_operands = 0 : i64, tpu.core_type = #tpu.core_type<tc>, window_params = [{transform_indices = @transform_0, window_bounds = array<i64: 4, 128>}, {pipeline_mode = #tpu.pipeline_mode<synchronous>, transform_indices = @transform_1, window_bounds = array<i64: 96, 4>}, {pipeline_mode = #tpu.pipeline_mode<synchronous>, transform_indices = @transform_2, window_bounds = array<i64: 32, 32>}, {pipeline_mode = #tpu.pipeline_mode<synchronous>, transform_indices = @transform_3, window_bounds = array<i64: 64, 32>}, {pipeline_mode = #tpu.pipeline_mode<synchronous>, transform_indices = @transform_4, window_bounds = array<i64: 8, 64>}, {pipeline_mode = #tpu.pipeline_mode<synchronous>, transform_indices = @transform_5, window_bounds = array<i64: 8, 64>}, {pipeline_mode = #tpu.pipeline_mode<synchronous>, transform_indices = @transform_6, window_bounds = array<i64: 136, 1>}, {transform_indices = @transform_7, window_bounds = array<i64: 8, 128>}]} {
    %c0 = arith.constant 0 : index
    %c0_0 = arith.constant 0 : index
    %0 = vector.load %arg2[%c0, %c0_0] : memref<96x4xf32, #tpu.memory_space<vmem>>, vector<96x4xf32>
    %c0_1 = arith.constant 0 : index
    %c0_2 = arith.constant 0 : index
    %1 = vector.load %arg3[%c0_1, %c0_2] : memref<32x32xf32, #tpu.memory_space<vmem>>, vector<32x32xf32>
    %c0_3 = arith.constant 0 : index
    %c0_4 = arith.constant 0 : index
    %2 = vector.load %arg4[%c0_3, %c0_4] : memref<64x32xf32, #tpu.memory_space<vmem>>, vector<64x32xf32>
    %c0_5 = arith.constant 0 : index
    %c0_6 = arith.constant 0 : index
    %3 = vector.load %arg5[%c0_5, %c0_6] : memref<8x64xf32, #tpu.memory_space<vmem>>, vector<8x64xf32>
    %c0_7 = arith.constant 0 : index
    %c0_8 = arith.constant 0 : index
    %4 = vector.load %arg6[%c0_7, %c0_8] : memref<8x64xf32, #tpu.memory_space<vmem>>, vector<8x64xf32>
    %c0_9 = arith.constant 0 : index
    %c0_10 = arith.constant 0 : index
    %5 = vector.load %arg7[%c0_9, %c0_10] : memref<136x1xf32, #tpu.memory_space<vmem>>, vector<32x1xf32>
    %c32 = arith.constant 32 : index
    %c0_11 = arith.constant 0 : index
    %6 = vector.load %arg7[%c32, %c0_11] : memref<136x1xf32, #tpu.memory_space<vmem>>, vector<32x1xf32>
    %c64 = arith.constant 64 : index
    %c0_12 = arith.constant 0 : index
    %7 = vector.load %arg7[%c64, %c0_12] : memref<136x1xf32, #tpu.memory_space<vmem>>, vector<64x1xf32>
    %c128 = arith.constant 128 : index
    %c0_13 = arith.constant 0 : index
    %8 = vector.load %arg7[%c128, %c0_13] : memref<136x1xf32, #tpu.memory_space<vmem>>, vector<8x1xf32>
    %c0_14 = arith.constant 0 : index
    %c0_15 = arith.constant 0 : index
    %9 = vector.load %arg1[%c0_14, %c0_15] : memref<4x128xf32, #tpu.memory_space<vmem>>, vector<4x128xf32>
    %cst = arith.constant dense<0.000000e+00> : vector<96x128xf32>
    %10 = tpu.matmul %0, %9, %cst {dimension_numbers = #tpu.dot_dimension_numbers<[1], [0], [0], [1], [0, 0, 1, 1], [], []>} : vector<96x4xf32>, vector<4x128xf32>, vector<96x128xf32> -> vector<96x128xf32>
    %11 = vector.extract_strided_slice %10 {offsets = [0, 0], sizes = [32, 128], strides = [1, 1]} : vector<96x128xf32> to vector<32x128xf32>
    %12 = vector.broadcast %5 : vector<32x1xf32> to vector<32x128xf32>
    %13 = arith.addf %11, %12 : vector<32x128xf32>
    %14 = math.tanh %13 : vector<32x128xf32>
    %cst_16 = arith.constant dense<0.000000e+00> : vector<32x128xf32>
    %15 = tpu.matmul %1, %14, %cst_16 {dimension_numbers = #tpu.dot_dimension_numbers<[1], [0], [0], [1], [0, 0, 1, 1], [], []>} : vector<32x32xf32>, vector<32x128xf32>, vector<32x128xf32> -> vector<32x128xf32>
    %16 = vector.broadcast %6 : vector<32x1xf32> to vector<32x128xf32>
    %17 = arith.addf %15, %16 : vector<32x128xf32>
    %18 = math.tanh %17 : vector<32x128xf32>
    %cst_17 = arith.constant dense<0.000000e+00> : vector<64x128xf32>
    %19 = tpu.matmul %2, %18, %cst_17 {dimension_numbers = #tpu.dot_dimension_numbers<[1], [0], [0], [1], [0, 0, 1, 1], [], []>} : vector<64x32xf32>, vector<32x128xf32>, vector<64x128xf32> -> vector<64x128xf32>
    %20 = vector.extract_strided_slice %10 {offsets = [32, 0], sizes = [64, 128], strides = [1, 1]} : vector<96x128xf32> to vector<64x128xf32>
    %21 = arith.addf %19, %20 : vector<64x128xf32>
    %22 = vector.broadcast %7 : vector<64x1xf32> to vector<64x128xf32>
    %23 = arith.addf %21, %22 : vector<64x128xf32>
    %24 = math.tanh %23 : vector<64x128xf32>
    %cst_18 = arith.constant dense<0.000000e+00> : vector<8x128xf32>
    %25 = tpu.matmul %3, %24, %cst_18 {dimension_numbers = #tpu.dot_dimension_numbers<[1], [0], [0], [1], [0, 0, 1, 1], [], []>} : vector<8x64xf32>, vector<64x128xf32>, vector<8x128xf32> -> vector<8x128xf32>
    %26 = arith.mulf %24, %24 : vector<64x128xf32>
    %cst_19 = arith.constant dense<0.000000e+00> : vector<8x128xf32>
    %27 = tpu.matmul %4, %26, %cst_19 {dimension_numbers = #tpu.dot_dimension_numbers<[1], [0], [0], [1], [0, 0, 1, 1], [], []>} : vector<8x64xf32>, vector<64x128xf32>, vector<8x128xf32> -> vector<8x128xf32>
    %28 = arith.addf %25, %27 : vector<8x128xf32>
    %29 = vector.broadcast %8 : vector<8x1xf32> to vector<8x128xf32>
    %30 = arith.addf %28, %29 : vector<8x128xf32>
    %c0_20 = arith.constant 0 : index
    %c0_21 = arith.constant 0 : index
    %31 = vector.load %arg8[%c0_20, %c0_21] : memref<8x128xf32, #tpu.memory_space<vmem>>, vector<8x128xf32>
    tpu.vector_store %arg8[%c0_20, %c0_21], %30 {strides = array<i32>} : memref<8x128xf32, #tpu.memory_space<vmem>>, vector<8x128xf32>,
    return
  }
  func.func @transform_0(%arg0: i32) -> (i32, i32) {
    %c0_i32 = arith.constant 0 : i32
    %c0_i32_0 = arith.constant 0 : i32
    return %c0_i32, %arg0 : i32, i32
  }
  func.func @transform_1(%arg0: i32) -> (i32, i32) {
    %c0_i32 = arith.constant 0 : i32
    %c0_i32_0 = arith.constant 0 : i32
    %c0_i32_1 = arith.constant 0 : i32
    return %c0_i32, %c0_i32_0 : i32, i32
  }
  func.func @transform_2(%arg0: i32) -> (i32, i32) {
    %c0_i32 = arith.constant 0 : i32
    %c0_i32_0 = arith.constant 0 : i32
    %c0_i32_1 = arith.constant 0 : i32
    return %c0_i32, %c0_i32_0 : i32, i32
  }
  func.func @transform_3(%arg0: i32) -> (i32, i32) {
    %c0_i32 = arith.constant 0 : i32
    %c0_i32_0 = arith.constant 0 : i32
    %c0_i32_1 = arith.constant 0 : i32
    return %c0_i32, %c0_i32_0 : i32, i32
  }
  func.func @transform_4(%arg0: i32) -> (i32, i32) {
    %c0_i32 = arith.constant 0 : i32
    %c0_i32_0 = arith.constant 0 : i32
    %c0_i32_1 = arith.constant 0 : i32
    return %c0_i32, %c0_i32_0 : i32, i32
  }
  func.func @transform_5(%arg0: i32) -> (i32, i32) {
    %c0_i32 = arith.constant 0 : i32
    %c0_i32_0 = arith.constant 0 : i32
    %c0_i32_1 = arith.constant 0 : i32
    return %c0_i32, %c0_i32_0 : i32, i32
  }
  func.func @transform_6(%arg0: i32) -> (i32, i32) {
    %c0_i32 = arith.constant 0 : i32
    %c0_i32_0 = arith.constant 0 : i32
    %c0_i32_1 = arith.constant 0 : i32
    return %c0_i32, %c0_i32_0 : i32, i32
  }
  func.func @transform_7(%arg0: i32) -> (i32, i32) {
    %c0_i32 = arith.constant 0 : i32
    %c0_i32_0 = arith.constant 0 : i32
    return %c0_i32, %arg0 : i32, i32
  }
}

</mosaic_0001>

<llo_original>
// kernel: tpu_custom_call.1
$region0: #{tpu_custom_call.1}
  #allocation0 [shape = 'u32[]', space=smem, size = 0x4, offset = 0x4, fixed_abs, tag = 'smem constant byte address 0x4 - core index']
  #allocation1 [shape = 'u32[144,128]{1,0:T(1,128)}', space=vmem, size = 0x12000, scoped, tag = 'internal scratch']
  %s0 = inlined_call_operand.vmem [shape: f32[4,128], index: 0, kind: input, shape index: {}]
  %s1 = inlined_call_operand.vmem [shape: f32[96,4], index: 1, kind: input, shape index: {}]
  %s2 = inlined_call_operand.vmem [shape: f32[32,32], index: 2, kind: input, shape index: {}]
  %s3 = inlined_call_operand.vmem [shape: f32[64,32], index: 3, kind: input, shape index: {}]
  %s4 = inlined_call_operand.vmem [shape: f32[8,64], index: 4, kind: input, shape index: {}]
  %s5 = inlined_call_operand.vmem [shape: f32[8,64], index: 5, kind: input, shape index: {}]
  %s6 = inlined_call_operand.vmem [shape: f32[136,1], index: 6, kind: input, shape index: {}]
  %s7 = inlined_call_operand.hbm [shape: f32[8,128], index: 7, kind: output, shape index: {}]
  %s8 = sld [smem:[#allocation0]]
  $region38: #{tpu_custom_call.1} parent=0
    _
  %s10 = ssub.s32 1, %s8
  %s11 = scalar_select 0, %s10, %s8
  $region1: #{tpu_custom_call.1} parent=0
    #allocation2 [shape = 'u8[4096]{0}', space=vmem, size = 0x1000, scoped, tag = 'output window, operand 0, single buffered']
    #allocation3 [shape = 's32[1]{0}', space=sflag, size = 0x4, scoped, tag = 'scoped memory for tpu_custom_call.1']
    %12 = vsyncpa [#allocation3], 0
    // Predicated region
    $region2: #{tpu_custom_call.1} parent=1 // pred_check
      _
    $region3: #{tpu_custom_call.1} parent=1 // pred_check_branch
      %14 = sbr.rel (0) target = $region5
    $region4: #{tpu_custom_call.1} parent=1 // pred_region
      _
    $region5: #{tpu_custom_call.1} parent=1 // pred_fallthru
      _
    // Predicated region
    $region6: #{tpu_custom_call.1} parent=1 // pred_check
      _
    $region7: #{tpu_custom_call.1} parent=1 // pred_check_branch
      %16 = sbr.rel (0) target = $region9
    $region8: #{tpu_custom_call.1} parent=1 // pred_region
      _
    $region9: #{tpu_custom_call.1} parent=1 // pred_fallthru
      _
    // Predicated region
    $region10: #{tpu_custom_call.1} parent=1 // pred_check
      _
    $region11: #{tpu_custom_call.1} parent=1 // pred_check_branch
      %18 = sbr.rel (0) target = $region13
    $region12: #{tpu_custom_call.1} parent=1 // pred_region
      _
    $region13: #{tpu_custom_call.1} parent=1 // pred_fallthru
      _
    // Predicated region
    $region14: #{tpu_custom_call.1} parent=1 // pred_check
      _
    $region15: #{tpu_custom_call.1} parent=1 // pred_check_branch
      %20 = sbr.rel (0) target = $region17
    $region16: #{tpu_custom_call.1} parent=1 // pred_region
      _
    $region17: #{tpu_custom_call.1} parent=1 // pred_fallthru
      _
    // Predicated region
    $region18: #{tpu_custom_call.1} parent=1 // pred_check
      _
    $region19: #{tpu_custom_call.1} parent=1 // pred_check_branch
      %22 = sbr.rel (0) target = $region21
    $region20: #{tpu_custom_call.1} parent=1 // pred_region
      _
    $region21: #{tpu_custom_call.1} parent=1 // pred_fallthru
      _
    // Predicated region
    $region22: #{tpu_custom_call.1} parent=1 // pred_check
      _
    $region23: #{tpu_custom_call.1} parent=1 // pred_check_branch
      %24 = sbr.rel (0) target = $region25
    $region24: #{tpu_custom_call.1} parent=1 // pred_region
      _
    $region25: #{tpu_custom_call.1} parent=1 // pred_fallthru
      _
    // Predicated region
    $region26: #{tpu_custom_call.1} parent=1 // pred_check
      _
    $region27: #{tpu_custom_call.1} parent=1 // pred_check_branch
      %26 = sbr.rel (0) target = $region29
    $region28: #{tpu_custom_call.1} parent=1 // pred_region
      _
    $region29: #{tpu_custom_call.1} parent=1 // pred_fallthru
      _
    %v27 = vld [vmem:[%s1] sm:$0xff]
    %v28 = vld [vmem:[%s1 + $0x8] sm:$0xff]
    %v29 = vld [vmem:[%s1 + $0x10] sm:$0xff]
    %v30 = vld [vmem:[%s1 + $0x18] sm:$0xff]
    %v31 = vld [vmem:[%s1 + $0x20] sm:$0xff]
    %v32 = vld [vmem:[%s1 + $0x28] sm:$0xff]
    %v33 = vld [vmem:[%s1 + $0x30] sm:$0xff]
    %v34 = vld [vmem:[%s1 + $0x38] sm:$0xff]
    %v35 = vld [vmem:[%s1 + $0x40] sm:$0xff]
    %v36 = vld [vmem:[%s1 + $0x48] sm:$0xff]
    %v37 = vld [vmem:[%s1 + $0x50] sm:$0xff]
    %v38 = vld [vmem:[%s1 + $0x58] sm:$0xff]
    %v39 = vld [vmem:[%s2] sm:$0xff]
    %v40 = vld [vmem:[%s2 + $0x8] sm:$0xff]
    %v41 = vld [vmem:[%s2 + $0x10] sm:$0xff]
    %v42 = vld [vmem:[%s2 + $0x18] sm:$0xff]
    %v43 = vld [vmem:[%s3] sm:$0xff]
    %v44 = vld [vmem:[%s3 + $0x8] sm:$0xff]
    %v45 = vld [vmem:[%s3 + $0x10] sm:$0xff]
    %v46 = vld [vmem:[%s3 + $0x18] sm:$0xff]
    %v47 = vld [vmem:[%s3 + $0x20] sm:$0xff]
    %v48 = vld [vmem:[%s3 + $0x28] sm:$0xff]
    %v49 = vld [vmem:[%s3 + $0x30] sm:$0xff]
    %v50 = vld [vmem:[%s3 + $0x38] sm:$0xff]
    %v51 = vld [vmem:[%s4] sm:$0xff]
    %v52 = vld [vmem:[%s5] sm:$0xff]
    %v53 = vld [vmem:[%s6] sm:$0xff]
    %v54 = vld [vmem:[%s6 + $0x8] sm:$0xff]
    %v55 = vld [vmem:[%s6 + $0x10] sm:$0xff]
    %v56 = vld [vmem:[%s6 + $0x18] sm:$0xff]
    %v57 = vld [vmem:[%s6 + $0x20] sm:$0xff]
    %v58 = vld [vmem:[%s6 + $0x28] sm:$0xff]
    %v59 = vld [vmem:[%s6 + $0x30] sm:$0xff]
    %v60 = vld [vmem:[%s6 + $0x38] sm:$0xff]
    %v61 = vld [vmem:[%s6 + $0x40] sm:$0xff]
    %v62 = vld [vmem:[%s6 + $0x48] sm:$0xff]
    %v63 = vld [vmem:[%s6 + $0x50] sm:$0xff]
    %v64 = vld [vmem:[%s6 + $0x58] sm:$0xff]
    %v65 = vld [vmem:[%s6 + $0x60] sm:$0xff]
    %v66 = vld [vmem:[%s6 + $0x68] sm:$0xff]
    %v67 = vld [vmem:[%s6 + $0x70] sm:$0xff]
    %v68 = vld [vmem:[%s6 + $0x78] sm:$0xff]
    %v69 = vld [vmem:[%s6 + $0x80] sm:$0xff]
    %v70 = vld [vmem:[%s0] sm:$0xf]
    %vm71 = vcmask 31744
    %v73 = vsel %vm71, %v27, 0
    %v76 = vsel %vm71, %v28, 0
    %v79 = vsel %vm71, %v29, 0
    %v82 = vsel %vm71, %v30, 0
    %v85 = vsel %vm71, %v31, 0
    %v88 = vsel %vm71, %v32, 0
    %v91 = vsel %vm71, %v33, 0
    %v94 = vsel %vm71, %v34, 0
    %v97 = vsel %vm71, %v35, 0
    %v100 = vsel %vm71, %v36, 0
    %v103 = vsel %vm71, %v37, 0
    %v106 = vsel %vm71, %v38, 0
    %vm108 = vcmask 1043456
    %v110 = vsel %vm108, %v70, 0
    %112 = vmatprep.subr.mxu0 0.0
    %113 = vmatpush1.msra.mxu0 %v110
    %114 = vmatprep.subr.mxu0 0.0
    %115 = vmatpush1.msra.mxu0 0.0
    %116 = vmatprep.subr.mxu0 0.0
    %117 = vmatpush1.msra.mxu0 0.0
    %118 = vmatprep.subr.mxu0 0.0
    %119 = vmatpush1.msra.mxu0 0.0
    %120 = vmatprep.subr.mxu0 0.0
    %121 = vmatpush1.msra.mxu0 0.0
    %122 = vmatprep.subr.mxu0 0.0
    %123 = vmatpush1.msra.mxu0 0.0
    %124 = vmatprep.subr.mxu0 0.0
    %125 = vmatpush1.msra.mxu0 0.0
    %126 = vmatprep.subr.mxu0 0.0
    %127 = vmatpush1.msra.mxu0 0.0
    %128 = vmatprep.subr.mxu0 0.0
    %129 = vmatpush1.msra.mxu0 0.0
    %130 = vmatprep.subr.mxu0 0.0
    %131 = vmatpush1.msra.mxu0 0.0
    %132 = vmatprep.subr.mxu0 0.0
    %133 = vmatpush1.msra.mxu0 0.0
    %134 = vmatprep.subr.mxu0 0.0
    %135 = vmatpush1.msra.mxu0 0.0
    %136 = vmatprep.subr.mxu0 0.0
    %137 = vmatpush1.msra.mxu0 0.0
    %138 = vmatprep.subr.mxu0 0.0
    %139 = vmatpush1.msra.mxu0 0.0
    %140 = vmatprep.subr.mxu0 0.0
    %141 = vmatpush1.msra.mxu0 0.0
    %142 = vmatprep.subr.mxu0 0.0
    %143 = vmatpush1.msra.mxu0 0.0
    %144 = vmatprep.subr.mxu0 0.0
    %145 = vmatpush1.msra.mxu0 0.0
    %146 = vmatprep.subr.mxu0 0.0
    %147 = vmatpush1.msra.mxu0 0.0
    %148 = vmatprep.subr.mxu0 0.0
    %149 = vmatpush1.msra.mxu0 0.0
    %150 = vmatprep.subr.mxu0 0.0
    %151 = vmatpush1.msra.mxu0 0.0
    %152 = vmatprep.subr.mxu0 0.0
    %153 = vmatpush1.msra.mxu0 0.0
    %154 = vmatprep.subr.mxu0 0.0
    %155 = vmatpush1.msra.mxu0 0.0
    %156 = vmatprep.subr.mxu0 0.0
    %157 = vmatpush1.msra.mxu0 0.0
    %158 = vmatprep.subr.mxu0 0.0
    %159 = vmatpush1.msra.mxu0 0.0
    %160 = vmatprep.subr.mxu0 0.0
    %161 = vmatpush1.msra.mxu0 0.0
    %162 = vmatprep.subr.mxu0 0.0
    %163 = vmatpush1.msra.mxu0 0.0
    %164 = vmatprep.subr.mxu0 0.0
    %165 = vmatpush1.msra.mxu0 0.0
    %166 = vmatprep.subr.mxu0 0.0
    %167 = vmatpush1.msra.mxu0 0.0
    %168 = vmatprep.subr.mxu0 0.0
    %169 = vmatpush1.msra.mxu0 0.0
    %170 = vmatprep.subr.mxu0 0.0
    %171 = vmatpush1.msra.mxu0 0.0
    %172 = vmatprep.subr.mxu0 0.0
    %173 = vmatpush1.msra.mxu0 0.0
    %174 = vmatprep.subr.mxu0 0.0
    %175 = vmatpush1.msra.mxu0 0.0
    %176 = vmatprep.mubr.f32.mxu0 0.0
    %177 = vmatmul.mubr.f32.gmra.mrb[0].mxu0 %v73
    %v178 = vpop.f32.mrb[0].mxu0
    %v179 = vadd.f32 0.0, %v178
    %v180 = vpop.f32.mrb[0].mxu0
    %181 = vmatprep.mubr.f32.mxu0 0.0
    %182 = vmatmul.mubr.f32.gmra.mrb[0].mxu0 %v76
    %v183 = vpop.f32.mrb[0].mxu0
    %v184 = vadd.f32 0.0, %v183
    %v185 = vpop.f32.mrb[0].mxu0
    %186 = vmatprep.mubr.f32.mxu0 0.0
    %187 = vmatmul.mubr.f32.gmra.mrb[0].mxu0 %v79
    %v188 = vpop.f32.mrb[0].mxu0
    %v189 = vadd.f32 0.0, %v188
    %v190 = vpop.f32.mrb[0].mxu0
    %191 = vmatprep.mubr.f32.mxu0 0.0
    %192 = vmatmul.mubr.f32.gmra.mrb[0].mxu0 %v82
    %v193 = vpop.f32.mrb[0].mxu0
    %v194 = vadd.f32 0.0, %v193
    %v195 = vpop.f32.mrb[0].mxu0
    %196 = vmatprep.mubr.f32.mxu0 0.0
    %197 = vmatmul.mubr.f32.gmra.mrb[0].mxu0 %v85
    %v198 = vpop.f32.mrb[0].mxu0
    %v199 = vadd.f32 0.0, %v198
    %v200 = vpop.f32.mrb[0].mxu0
    %201 = vmatprep.mubr.f32.mxu0 0.0
    %202 = vmatmul.mubr.f32.gmra.mrb[0].mxu0 %v88
    %v203 = vpop.f32.mrb[0].mxu0
    %v204 = vadd.f32 0.0, %v203
    %v205 = vpop.f32.mrb[0].mxu0
    %206 = vmatprep.mubr.f32.mxu0 0.0
    %207 = vmatmul.mubr.f32.gmra.mrb[0].mxu0 %v91
    %v208 = vpop.f32.mrb[0].mxu0
    %v209 = vadd.f32 0.0, %v208
    %v210 = vpop.f32.mrb[0].mxu0
    %211 = vmatprep.mubr.f32.mxu0 0.0
    %212 = vmatmul.mubr.f32.gmra.mrb[0].mxu0 %v94
    %v213 = vpop.f32.mrb[0].mxu0
    %v214 = vadd.f32 0.0, %v213
    %v215 = vpop.f32.mrb[0].mxu0
    %216 = vmatprep.mubr.f32.mxu0 0.0
    %217 = vmatmul.mubr.f32.gmra.mrb[0].mxu0 %v97
    %v218 = vpop.f32.mrb[0].mxu0
    %v219 = vadd.f32 0.0, %v218
    %v220 = vpop.f32.mrb[0].mxu0
    %221 = vmatprep.mubr.f32.mxu0 0.0
    %222 = vmatmul.mubr.f32.gmra.mrb[0].mxu0 %v100
    %v223 = vpop.f32.mrb[0].mxu0
    %v224 = vadd.f32 0.0, %v223
    %v225 = vpop.f32.mrb[0].mxu0
    %226 = vmatprep.mubr.f32.mxu0 0.0
    %227 = vmatmul.mubr.f32.gmra.mrb[0].mxu0 %v103
    %v228 = vpop.f32.mrb[0].mxu0
    %v229 = vadd.f32 0.0, %v228
    %v230 = vpop.f32.mrb[0].mxu0
    %231 = vmatprep.mubr.f32.mxu0 0.0
    %232 = vmatmul.mubr.f32.gmra.mrb[0].mxu0 %v106
    %v233 = vpop.f32.mrb[0].mxu0
    %v234 = vadd.f32 0.0, %v233
    %v235 = vpop.f32.mrb[0].mxu0
    %236 = vdwg.mxu0
    %238 = vset.pattern.permute.xlu0 0
    %239 = vperm.xlu0 %238, %v53
    %v240 = vpop.permute.xlu0 %239
    %243 = vset.pattern.permute.xlu0 0
    %244 = vperm.xlu0 %243, %v54
    %v245 = vpop.permute.xlu0 %244
    %248 = vset.pattern.permute.xlu0 0
    %249 = vperm.xlu0 %248, %v55
    %v250 = vpop.permute.xlu0 %249
    %253 = vset.pattern.permute.xlu0 0
    %254 = vperm.xlu0 %253, %v56
    %v255 = vpop.permute.xlu0 %254
    %v257 = vadd.f32 %v179, %v240
    %v258 = vadd.f32 %v184, %v245
    %v259 = vadd.f32 %v189, %v250
    %v260 = vadd.f32 %v194, %v255
    %v261 = vtanh.pop %v257
    %v262 = vtanh.pop %v258
    %v263 = vtanh.pop %v259
    %v264 = vtanh.pop %v260
    %266 = vset.pattern.permute.xlu0 0
    %267 = vperm.xlu0 %266, %v57
    %v268 = vpop.permute.xlu0 %267
    %271 = vset.pattern.permute.xlu0 0
    %272 = vperm.xlu0 %271, %v58
    %v273 = vpop.permute.xlu0 %272
    %276 = vset.pattern.permute.xlu0 0
    %277 = vperm.xlu0 %276, %v59
    %v278 = vpop.permute.xlu0 %277
    %281 = vset.pattern.permute.xlu0 0
    %282 = vperm.xlu0 %281, %v60
    %v283 = vpop.permute.xlu0 %282
    %vm285 = vcmask 261120
    %v287 = vsel %vm285, %v39, 0
    %v290 = vsel %vm285, %v40, 0
    %v293 = vsel %vm285, %v41, 0
    %v296 = vsel %vm285, %v42, 0
    %298 = vmatprep.subr.mxu0 0.0
    %299 = vmatpush1.msra.mxu0 %v261
    %300 = vmatprep.subr.mxu0 0.0
    %301 = vmatpush1.msra.mxu0 %v262
    %302 = vmatprep.subr.mxu0 0.0
    %303 = vmatpush1.msra.mxu0 %v263
    %304 = vmatprep.subr.mxu0 0.0
    %305 = vmatpush1.msra.mxu0 %v264
    %306 = vmatprep.subr.mxu0 0.0
    %307 = vmatpush1.msra.mxu0 0.0
    %308 = vmatprep.subr.mxu0 0.0
    %309 = vmatpush1.msra.mxu0 0.0
    %310 = vmatprep.subr.mxu0 0.0
    %311 = vmatpush1.msra.mxu0 0.0
    %312 = vmatprep.subr.mxu0 0.0
    %313 = vmatpush1.msra.mxu0 0.0
    %314 = vmatprep.subr.mxu0 0.0
    %315 = vmatpush1.msra.mxu0 0.0
    %316 = vmatprep.subr.mxu0 0.0
    %317 = vmatpush1.msra.mxu0 0.0
    %318 = vmatprep.subr.mxu0 0.0
    %319 = vmatpush1.msra.mxu0 0.0
    %320 = vmatprep.subr.mxu0 0.0
    %321 = vmatpush1.msra.mxu0 0.0
    %322 = vmatprep.subr.mxu0 0.0
    %323 = vmatpush1.msra.mxu0 0.0
    %324 = vmatprep.subr.mxu0 0.0
    %325 = vmatpush1.msra.mxu0 0.0
    %326 = vmatprep.subr.mxu0 0.0
    %327 = vmatpush1.msra.mxu0 0.0
    %328 = vmatprep.subr.mxu0 0.0
    %329 = vmatpush1.msra.mxu0 0.0
    %330 = vmatprep.subr.mxu0 0.0
    %331 = vmatpush1.msra.mxu0 0.0
    %332 = vmatprep.subr.mxu0 0.0
    %333 = vmatpush1.msra.mxu0 0.0
    %334 = vmatprep.subr.mxu0 0.0
    %335 = vmatpush1.msra.mxu0 0.0
    %336 = vmatprep.subr.mxu0 0.0
    %337 = vmatpush1.msra.mxu0 0.0
    %338 = vmatprep.subr.mxu0 0.0
    %339 = vmatpush1.msra.mxu0 0.0
    %340 = vmatprep.subr.mxu0 0.0
    %341 = vmatpush1.msra.mxu0 0.0
    %342 = vmatprep.subr.mxu0 0.0
    %343 = vmatpush1.msra.mxu0 0.0
    %344 = vmatprep.subr.mxu0 0.0
    %345 = vmatpush1.msra.mxu0 0.0
    %346 = vmatprep.subr.mxu0 0.0
    %347 = vmatpush1.msra.mxu0 0.0
    %348 = vmatprep.subr.mxu0 0.0
    %349 = vmatpush1.msra.mxu0 0.0
    %350 = vmatprep.subr.mxu0 0.0
    %351 = vmatpush1.msra.mxu0 0.0
    %352 = vmatprep.subr.mxu0 0.0
    %353 = vmatpush1.msra.mxu0 0.0
    %354 = vmatprep.subr.mxu0 0.0
    %355 = vmatpush1.msra.mxu0 0.0
    %356 = vmatprep.subr.mxu0 0.0
    %357 = vmatpush1.msra.mxu0 0.0
    %358 = vmatprep.subr.mxu0 0.0
    %359 = vmatpush1.msra.mxu0 0.0
    %360 = vmatprep.subr.mxu0 0.0
    %361 = vmatpush1.msra.mxu0 0.0
    %362 = vmatprep.mubr.f32.mxu0 0.0
    %363 = vmatmul.mubr.f32.gmra.mrb[0].mxu0 %v287
    %v364 = vpop.f32.mrb[0].mxu0
    %v365 = vadd.f32 %v268, %v364
    %v366 = vpop.f32.mrb[0].mxu0
    %367 = vmatprep.mubr.f32.mxu0 0.0
    %368 = vmatmul.mubr.f32.gmra.mrb[0].mxu0 %v290
    %v369 = vpop.f32.mrb[0].mxu0
    %v370 = vadd.f32 %v273, %v369
    %v371 = vpop.f32.mrb[0].mxu0
    %372 = vmatprep.mubr.f32.mxu0 0.0
    %373 = vmatmul.mubr.f32.gmra.mrb[0].mxu0 %v293
    %v374 = vpop.f32.mrb[0].mxu0
    %v375 = vadd.f32 %v278, %v374
    %v376 = vpop.f32.mrb[0].mxu0
    %377 = vmatprep.mubr.f32.mxu0 0.0
    %378 = vmatmul.mubr.f32.gmra.mrb[0].mxu0 %v296
    %v379 = vpop.f32.mrb[0].mxu0
    %v380 = vadd.f32 %v283, %v379
    %v381 = vpop.f32.mrb[0].mxu0
    %382 = vdwg.mxu0
    %v383 = vtanh.pop %v365
    %v384 = vtanh.pop %v370
    %v385 = vtanh.pop %v375
    %v386 = vtanh.pop %v380
    %v388 = vsel %vm285, %v43, 0
    %v391 = vsel %vm285, %v44, 0
    %v394 = vsel %vm285, %v45, 0
    %v397 = vsel %vm285, %v46, 0
    %v400 = vsel %vm285, %v47, 0
    %v403 = vsel %vm285, %v48, 0
    %v406 = vsel %vm285, %v49, 0
    %v409 = vsel %vm285, %v50, 0
    %411 = vmatprep.subr.mxu0 0.0
    %412 = vmatpush1.msra.mxu0 %v383
    %413 = vmatprep.subr.mxu0 0.0
    %414 = vmatpush1.msra.mxu0 %v384
    %415 = vmatprep.subr.mxu0 0.0
    %416 = vmatpush1.msra.mxu0 %v385
    %417 = vmatprep.subr.mxu0 0.0
    %418 = vmatpush1.msra.mxu0 %v386
    %419 = vmatprep.subr.mxu0 0.0
    %420 = vmatpush1.msra.mxu0 0.0
    %421 = vmatprep.subr.mxu0 0.0
    %422 = vmatpush1.msra.mxu0 0.0
    %423 = vmatprep.subr.mxu0 0.0
    %424 = vmatpush1.msra.mxu0 0.0
    %425 = vmatprep.subr.mxu0 0.0
    %426 = vmatpush1.msra.mxu0 0.0
    %427 = vmatprep.subr.mxu0 0.0
    %428 = vmatpush1.msra.mxu0 0.0
    %429 = vmatprep.subr.mxu0 0.0
    %430 = vmatpush1.msra.mxu0 0.0
    %431 = vmatprep.subr.mxu0 0.0
    %432 = vmatpush1.msra.mxu0 0.0
    %433 = vmatprep.subr.mxu0 0.0
    %434 = vmatpush1.msra.mxu0 0.0
    %435 = vmatprep.subr.mxu0 0.0
    %436 = vmatpush1.msra.mxu0 0.0
    %437 = vmatprep.subr.mxu0 0.0
    %438 = vmatpush1.msra.mxu0 0.0
    %439 = vmatprep.subr.mxu0 0.0
    %440 = vmatpush1.msra.mxu0 0.0
    %441 = vmatprep.subr.mxu0 0.0
    %442 = vmatpush1.msra.mxu0 0.0
    %443 = vmatprep.subr.mxu0 0.0
    %444 = vmatpush1.msra.mxu0 0.0
    %445 = vmatprep.subr.mxu0 0.0
    %446 = vmatpush1.msra.mxu0 0.0
    %447 = vmatprep.subr.mxu0 0.0
    %448 = vmatpush1.msra.mxu0 0.0
    %449 = vmatprep.subr.mxu0 0.0
    %450 = vmatpush1.msra.mxu0 0.0
    %451 = vmatprep.subr.mxu0 0.0
    %452 = vmatpush1.msra.mxu0 0.0
    %453 = vmatprep.subr.mxu0 0.0
    %454 = vmatpush1.msra.mxu0 0.0
    %455 = vmatprep.subr.mxu0 0.0
    %456 = vmatpush1.msra.mxu0 0.0
    %457 = vmatprep.subr.mxu0 0.0
    %458 = vmatpush1.msra.mxu0 0.0
    %459 = vmatprep.subr.mxu0 0.0
    %460 = vmatpush1.msra.mxu0 0.0
    %461 = vmatprep.subr.mxu0 0.0
    %462 = vmatpush1.msra.mxu0 0.0
    %463 = vmatprep.subr.mxu0 0.0
    %464 = vmatpush1.msra.mxu0 0.0
    %465 = vmatprep.subr.mxu0 0.0
    %466 = vmatpush1.msra.mxu0 0.0
    %467 = vmatprep.subr.mxu0 0.0
    %468 = vmatpush1.msra.mxu0 0.0
    %469 = vmatprep.subr.mxu0 0.0
    %470 = vmatpush1.msra.mxu0 0.0
    %471 = vmatprep.subr.mxu0 0.0
    %472 = vmatpush1.msra.mxu0 0.0
    %473 = vmatprep.subr.mxu0 0.0
    %474 = vmatpush1.msra.mxu0 0.0
    %475 = vmatprep.mubr.f32.mxu0 0.0
    %476 = vmatmul.mubr.f32.gmra.mrb[0].mxu0 %v388
    %v477 = vpop.f32.mrb[0].mxu0
    %v478 = vadd.f32 %v199, %v477
    %v479 = vpop.f32.mrb[0].mxu0
    %480 = vmatprep.mubr.f32.mxu0 0.0
    %481 = vmatmul.mubr.f32.gmra.mrb[0].mxu0 %v391
    %v482 = vpop.f32.mrb[0].mxu0
    %v483 = vadd.f32 %v204, %v482
    %v484 = vpop.f32.mrb[0].mxu0
    %485 = vmatprep.mubr.f32.mxu0 0.0
    %486 = vmatmul.mubr.f32.gmra.mrb[0].mxu0 %v394
    %v487 = vpop.f32.mrb[0].mxu0
    %v488 = vadd.f32 %v209, %v487
    %v489 = vpop.f32.mrb[0].mxu0
    %490 = vmatprep.mubr.f32.mxu0 0.0
    %491 = vmatmul.mubr.f32.gmra.mrb[0].mxu0 %v397
    %v492 = vpop.f32.mrb[0].mxu0
    %v493 = vadd.f32 %v214, %v492
    %v494 = vpop.f32.mrb[0].mxu0
    %495 = vmatprep.mubr.f32.mxu0 0.0
    %496 = vmatmul.mubr.f32.gmra.mrb[0].mxu0 %v400
    %v497 = vpop.f32.mrb[0].mxu0
    %v498 = vadd.f32 %v219, %v497
    %v499 = vpop.f32.mrb[0].mxu0
    %500 = vmatprep.mubr.f32.mxu0 0.0
    %501 = vmatmul.mubr.f32.gmra.mrb[0].mxu0 %v403
    %v502 = vpop.f32.mrb[0].mxu0
    %v503 = vadd.f32 %v224, %v502
    %v504 = vpop.f32.mrb[0].mxu0
    %505 = vmatprep.mubr.f32.mxu0 0.0
    %506 = vmatmul.mubr.f32.gmra.mrb[0].mxu0 %v406
    %v507 = vpop.f32.mrb[0].mxu0
    %v508 = vadd.f32 %v229, %v507
    %v509 = vpop.f32.mrb[0].mxu0
    %510 = vmatprep.mubr.f32.mxu0 0.0
    %511 = vmatmul.mubr.f32.gmra.mrb[0].mxu0 %v409
    %v512 = vpop.f32.mrb[0].mxu0
    %v513 = vadd.f32 %v234, %v512
    %v514 = vpop.f32.mrb[0].mxu0
    %515 = vdwg.mxu0
    %517 = vset.pattern.permute.xlu0 0
    %518 = vperm.xlu0 %517, %v61
    %v519 = vpop.permute.xlu0 %518
    %522 = vset.pattern.permute.xlu0 0
    %523 = vperm.xlu0 %522, %v62
    %v524 = vpop.permute.xlu0 %523
    %527 = vset.pattern.permute.xlu0 0
    %528 = vperm.xlu0 %527, %v63
    %v529 = vpop.permute.xlu0 %528
    %532 = vset.pattern.permute.xlu0 0
    %533 = vperm.xlu0 %532, %v64
    %v534 = vpop.permute.xlu0 %533
    %537 = vset.pattern.permute.xlu0 0
    %538 = vperm.xlu0 %537, %v65
    %v539 = vpop.permute.xlu0 %538
    %542 = vset.pattern.permute.xlu0 0
    %543 = vperm.xlu0 %542, %v66
    %v544 = vpop.permute.xlu0 %543
    %547 = vset.pattern.permute.xlu0 0
    %548 = vperm.xlu0 %547, %v67
    %v549 = vpop.permute.xlu0 %548
    %552 = vset.pattern.permute.xlu0 0
    %553 = vperm.xlu0 %552, %v68
    %v554 = vpop.permute.xlu0 %553
    %v556 = vadd.f32 %v478, %v519
    %v557 = vadd.f32 %v483, %v524
    %v558 = vadd.f32 %v488, %v529
    %v559 = vadd.f32 %v493, %v534
    %v560 = vadd.f32 %v498, %v539
    %v561 = vadd.f32 %v503, %v544
    %v562 = vadd.f32 %v508, %v549
    %v563 = vadd.f32 %v513, %v554
    %v564 = vtanh.pop %v556
    %v565 = vtanh.pop %v557
    %v566 = vtanh.pop %v558
    %v567 = vtanh.pop %v559
    %v568 = vtanh.pop %v560
    %v569 = vtanh.pop %v561
    %v570 = vtanh.pop %v562
    %v571 = vtanh.pop %v563
    %v572 = vmul.f32 %v564, %v564
    %v573 = vmul.f32 %v565, %v565
    %v574 = vmul.f32 %v566, %v566
    %v575 = vmul.f32 %v567, %v567
    %v576 = vmul.f32 %v568, %v568
    %v577 = vmul.f32 %v569, %v569
    %v578 = vmul.f32 %v570, %v570
    %v579 = vmul.f32 %v571, %v571
    %vm580 = vcmask 523264
    %v582 = vsel %vm580, %v52, 0
    %584 = vmatprep.subr.mxu0 0.0
    %585 = vmatpush1.msra.mxu0 %v572
    %586 = vmatprep.subr.mxu0 0.0
    %587 = vmatpush1.msra.mxu0 %v573
    %588 = vmatprep.subr.mxu0 0.0
    %589 = vmatpush1.msra.mxu0 %v574
    %590 = vmatprep.subr.mxu0 0.0
    %591 = vmatpush1.msra.mxu0 %v575
    %592 = vmatprep.subr.mxu0 0.0
    %593 = vmatpush1.msra.mxu0 %v576
    %594 = vmatprep.subr.mxu0 0.0
    %595 = vmatpush1.msra.mxu0 %v577
    %596 = vmatprep.subr.mxu0 0.0
    %597 = vmatpush1.msra.mxu0 %v578
    %598 = vmatprep.subr.mxu0 0.0
    %599 = vmatpush1.msra.mxu0 %v579
    %600 = vmatprep.subr.mxu0 0.0
    %601 = vmatpush1.msra.mxu0 0.0
    %602 = vmatprep.subr.mxu0 0.0
    %603 = vmatpush1.msra.mxu0 0.0
    %604 = vmatprep.subr.mxu0 0.0
    %605 = vmatpush1.msra.mxu0 0.0
    %606 = vmatprep.subr.mxu0 0.0
    %607 = vmatpush1.msra.mxu0 0.0
    %608 = vmatprep.subr.mxu0 0.0
    %609 = vmatpush1.msra.mxu0 0.0
    %610 = vmatprep.subr.mxu0 0.0
    %611 = vmatpush1.msra.mxu0 0.0
    %612 = vmatprep.subr.mxu0 0.0
    %613 = vmatpush1.msra.mxu0 0.0
    %614 = vmatprep.subr.mxu0 0.0
    %615 = vmatpush1.msra.mxu0 0.0
    %616 = vmatprep.subr.mxu0 0.0
    %617 = vmatpush1.msra.mxu0 0.0
    %618 = vmatprep.subr.mxu0 0.0
    %619 = vmatpush1.msra.mxu0 0.0
    %620 = vmatprep.subr.mxu0 0.0
    %621 = vmatpush1.msra.mxu0 0.0
    %622 = vmatprep.subr.mxu0 0.0
    %623 = vmatpush1.msra.mxu0 0.0
    %624 = vmatprep.subr.mxu0 0.0
    %625 = vmatpush1.msra.mxu0 0.0
    %626 = vmatprep.subr.mxu0 0.0
    %627 = vmatpush1.msra.mxu0 0.0
    %628 = vmatprep.subr.mxu0 0.0
    %629 = vmatpush1.msra.mxu0 0.0
    %630 = vmatprep.subr.mxu0 0.0
    %631 = vmatpush1.msra.mxu0 0.0
    %632 = vmatprep.subr.mxu0 0.0
    %633 = vmatpush1.msra.mxu0 0.0
    %634 = vmatprep.subr.mxu0 0.0
    %635 = vmatpush1.msra.mxu0 0.0
    %636 = vmatprep.subr.mxu0 0.0
    %637 = vmatpush1.msra.mxu0 0.0
    %638 = vmatprep.subr.mxu0 0.0
    %639 = vmatpush1.msra.mxu0 0.0
    %640 = vmatprep.subr.mxu0 0.0
    %641 = vmatpush1.msra.mxu0 0.0
    %642 = vmatprep.subr.mxu0 0.0
    %643 = vmatpush1.msra.mxu0 0.0
    %644 = vmatprep.subr.mxu0 0.0
    %645 = vmatpush1.msra.mxu0 0.0
    %646 = vmatprep.subr.mxu0 0.0
    %647 = vmatpush1.msra.mxu0 0.0
    %648 = vmatprep.mubr.f32.mxu0 0.0
    %649 = vmatmul.mubr.f32.gmra.mrb[0].mxu0 %v582
    %v650 = vpop.f32.mrb[0].mxu0
    %v651 = vadd.f32 0.0, %v650
    %v652 = vpop.f32.mrb[0].mxu0
    %653 = vdwg.mxu0
    %v655 = vsel %vm580, %v51, 0
    %657 = vmatprep.subr.mxu0 0.0
    %658 = vmatpush1.msra.mxu0 %v564
    %659 = vmatprep.subr.mxu0 0.0
    %660 = vmatpush1.msra.mxu0 %v565
    %661 = vmatprep.subr.mxu0 0.0
    %662 = vmatpush1.msra.mxu0 %v566
    %663 = vmatprep.subr.mxu0 0.0
    %664 = vmatpush1.msra.mxu0 %v567
    %665 = vmatprep.subr.mxu0 0.0
    %666 = vmatpush1.msra.mxu0 %v568
    %667 = vmatprep.subr.mxu0 0.0
    %668 = vmatpush1.msra.mxu0 %v569
    %669 = vmatprep.subr.mxu0 0.0
    %670 = vmatpush1.msra.mxu0 %v570
    %671 = vmatprep.subr.mxu0 0.0
    %672 = vmatpush1.msra.mxu0 %v571
    %673 = vmatprep.subr.mxu0 0.0
    %674 = vmatpush1.msra.mxu0 0.0
    %675 = vmatprep.subr.mxu0 0.0
    %676 = vmatpush1.msra.mxu0 0.0
    %677 = vmatprep.subr.mxu0 0.0
    %678 = vmatpush1.msra.mxu0 0.0
    %679 = vmatprep.subr.mxu0 0.0
    %680 = vmatpush1.msra.mxu0 0.0
    %681 = vmatprep.subr.mxu0 0.0
    %682 = vmatpush1.msra.mxu0 0.0
    %683 = vmatprep.subr.mxu0 0.0
    %684 = vmatpush1.msra.mxu0 0.0
    %685 = vmatprep.subr.mxu0 0.0
    %686 = vmatpush1.msra.mxu0 0.0
    %687 = vmatprep.subr.mxu0 0.0
    %688 = vmatpush1.msra.mxu0 0.0
    %689 = vmatprep.subr.mxu0 0.0
    %690 = vmatpush1.msra.mxu0 0.0
    %691 = vmatprep.subr.mxu0 0.0
    %692 = vmatpush1.msra.mxu0 0.0
    %693 = vmatprep.subr.mxu0 0.0
    %694 = vmatpush1.msra.mxu0 0.0
    %695 = vmatprep.subr.mxu0 0.0
    %696 = vmatpush1.msra.mxu0 0.0
    %697 = vmatprep.subr.mxu0 0.0
    %698 = vmatpush1.msra.mxu0 0.0
    %699 = vmatprep.subr.mxu0 0.0
    %700 = vmatpush1.msra.mxu0 0.0
    %701 = vmatprep.subr.mxu0 0.0
    %702 = vmatpush1.msra.mxu0 0.0
    %703 = vmatprep.subr.mxu0 0.0
    %704 = vmatpush1.msra.mxu0 0.0
    %705 = vmatprep.subr.mxu0 0.0
    %706 = vmatpush1.msra.mxu0 0.0
    %707 = vmatprep.subr.mxu0 0.0
    %708 = vmatpush1.msra.mxu0 0.0
    %709 = vmatprep.subr.mxu0 0.0
    %710 = vmatpush1.msra.mxu0 0.0
    %711 = vmatprep.subr.mxu0 0.0
    %712 = vmatpush1.msra.mxu0 0.0
    %713 = vmatprep.subr.mxu0 0.0
    %714 = vmatpush1.msra.mxu0 0.0
    %715 = vmatprep.subr.mxu0 0.0
    %716 = vmatpush1.msra.mxu0 0.0
    %717 = vmatprep.subr.mxu0 0.0
    %718 = vmatpush1.msra.mxu0 0.0
    %719 = vmatprep.subr.mxu0 0.0
    %720 = vmatpush1.msra.mxu0 0.0
    %721 = vmatprep.mubr.f32.mxu0 0.0
    %722 = vmatmul.mubr.f32.gmra.mrb[0].mxu0 %v655
    %v723 = vpop.f32.mrb[0].mxu0
    %v724 = vadd.f32 %v651, %v723
    %v725 = vpop.f32.mrb[0].mxu0
    %726 = vdwg.mxu0
    %728 = vset.pattern.permute.xlu0 0
    %729 = vperm.xlu0 %728, %v69
    %v730 = vpop.permute.xlu0 %729
    %v732 = vadd.f32 %v724, %v730
    %733 = vst [vmem:[#allocation2] sm:$0xff] %v732
    // Predicated region
    $region30: #{tpu_custom_call.1} parent=1 // pred_check
      _
    $region31: #{tpu_custom_call.1} parent=1 // pred_check_branch
      %735 = sbr.rel (0) target = $region33
    $region32: #{tpu_custom_call.1} parent=1 // pred_region
      %s737 = ssub.s32 128, 128
      %738 = vsyncadd [#allocation3], %s737
      %s740 = sshll.u32 [#allocation2], 4
      %s741 = int_to_ptr.vmem [resolvable:$true] %s740
      %743 = dma.vmem_to_hbm [thread:$0]  %s741, 128, %s7, [#allocation3]
    $region33: #{tpu_custom_call.1} parent=1 // pred_fallthru
      _
    // Predicated region
    $region34: #{tpu_custom_call.1} parent=1 // pred_check
      _
    $region35: #{tpu_custom_call.1} parent=1 // pred_check_branch
      %745 = sbr.rel (0) target = $region37
    $region36: #{tpu_custom_call.1} parent=1 // pred_region
      %746 = dma.done [#allocation3], 128
    $region37: #{tpu_custom_call.1} parent=1 // pred_fallthru
      _
    %747 = vsyncpa [#allocation3], 1

</llo_original>
